<compile_context>
chip_gen: v7x
topology: tpu7x:2x2x1
jax: 0.10.0
libtpu: 0.0.40
codegen_flags: <defaults>
</compile_context>

<pallas_src>
import numpy as np
import jax
import jax.numpy as jnp
from jax.experimental import pallas as pl
from jax.experimental.pallas import tpu as pltpu

_LANES = 128
_SUBLANES = 8
_MAX_TILE_ROWS = 2048  # 2048 x 128 f32 = 1 MiB per buffer per tile


def _broadcast_kernel(x_ref, y_ref, o_ref):
    x = x_ref[...]
    y = y_ref[...]
    # Faithful to the PyTorch forward: x * y + (x - x) / y - y
    o_ref[...] = x * y + (x - x) / y - y


def broadcast_forward(x, y):
    """Pallas equivalent of Broadcast().forward(x, y)."""
    out_shape = jnp.broadcast_shapes(x.shape, y.shape)
    out_dtype = jnp.result_type(x.dtype, y.dtype)

    # Broadcasting is metadata; materialization fuses into the reshape below.
    xb = jnp.broadcast_to(x, out_shape).astype(out_dtype)
    yb = jnp.broadcast_to(y, out_shape).astype(out_dtype)

    total = int(np.prod(out_shape)) if len(out_shape) else 1

    # Lane-dense 2D view: pad flat length to a multiple of 8*128 so the
    # 2D view is (rows, 128) with rows a multiple of the sublane pack.
    chunk = _SUBLANES * _LANES
    padded = ((total + chunk - 1) // chunk) * chunk
    pad = padded - total

    xf = xb.reshape(-1)
    yf = yb.reshape(-1)
    if pad:
        # Pad y with ones (avoids div-by-zero garbage); padded outputs are
        # sliced off below, so values there never matter.
        xf = jnp.concatenate([xf, jnp.zeros((pad,), out_dtype)])
        yf = jnp.concatenate([yf, jnp.ones((pad,), out_dtype)])

    rows = padded // _LANES  # multiple of 8
    x2d = xf.reshape(rows, _LANES)
    y2d = yf.reshape(rows, _LANES)

    tm = min(rows, _MAX_TILE_ROWS)
    grid = (pl.cdiv(rows, tm),)

    out2d = pl.pallas_call(
        _broadcast_kernel,
        out_shape=jax.ShapeDtypeStruct((rows, _LANES), out_dtype),
        grid=grid,
        in_specs=[
            pl.BlockSpec((tm, _LANES), lambda i: (i, 0)),
            pl.BlockSpec((tm, _LANES), lambda i: (i, 0)),
        ],
        out_specs=pl.BlockSpec((tm, _LANES), lambda i: (i, 0)),
        compiler_params=pltpu.CompilerParams(
            dimension_semantics=("parallel",),
            vmem_limit_bytes=32 * 1024 * 1024,
        ),
    )(x2d, y2d)

    out_flat = out2d.reshape(-1)
    if pad:
        out_flat = out_flat[:total]
    return out_flat.reshape(out_shape)


def _reference(x, y):
    return x * y + (x - x) / y - y


if __name__ == "__main__":
    key = jax.random.PRNGKey(0)
    k1, k2, k3, k4 = jax.random.split(key, 4)

    # Case 1: the shapes from the ONNX generator script (x broadcasts with y).
    x1 = jax.random.normal(k1, (1, 2, 3, 4), dtype=jnp.float32)
    y1 = jax.random.normal(k2, (3, 4), dtype=jnp.float32)
    out1 = jax.block_until_ready(broadcast_forward(x1, y1))
    ref1 = _reference(x1, y1)
    assert out1.shape == ref1.shape == (1, 2, 3, 4)
    np.testing.assert_allclose(np.asarray(out1), np.asarray(ref1),
                               rtol=1e-6, atol=1e-6)

    # Case 2: a slightly larger broadcast case.
    x2 = jax.random.normal(k3, (2, 4, 16, 16), dtype=jnp.float32)
    y2 = jax.random.normal(k4, (16, 16), dtype=jnp.float32)
    out2 = jax.block_until_ready(broadcast_forward(x2, y2))
    ref2 = _reference(x2, y2)
    assert out2.shape == ref2.shape == (2, 4, 16, 16)
    np.testing.assert_allclose(np.asarray(out2), np.asarray(ref2),
                               rtol=1e-6, atol=1e-6)

    print("KERNEL_OK")
</pallas_src>

<mosaic_0001>
module attributes {stable_mosaic.version = 11 : i64} {
  func.func @_broadcast_kernel(%arg0: i32, %arg1: memref<8x128xf32, #tpu.memory_space<vmem>>, %arg2: memref<8x128xf32, #tpu.memory_space<vmem>>, %arg3: memref<8x128xf32, #tpu.memory_space<vmem>>) attributes {dimension_semantics = [#tpu.dimension_semantics<parallel>], iteration_bounds = array<i64: 1>, scalar_prefetch = 0 : i64, scratch_operands = 0 : i64, tpu.core_type = #tpu.core_type<tc>, window_params = [{transform_indices = @transform_0, window_bounds = array<i64: 8, 128>}, {transform_indices = @transform_1, window_bounds = array<i64: 8, 128>}, {transform_indices = @transform_2, window_bounds = array<i64: 8, 128>}]} {
    %c0 = arith.constant 0 : index
    %c0_0 = arith.constant 0 : index
    %0 = vector.load %arg1[%c0, %c0_0] : memref<8x128xf32, #tpu.memory_space<vmem>>, vector<8x128xf32>
    %c0_1 = arith.constant 0 : index
    %c0_2 = arith.constant 0 : index
    %1 = vector.load %arg2[%c0_1, %c0_2] : memref<8x128xf32, #tpu.memory_space<vmem>>, vector<8x128xf32>
    %2 = arith.mulf %0, %1 : vector<8x128xf32>
    %3 = arith.subf %0, %0 : vector<8x128xf32>
    %4 = arith.divf %3, %1 : vector<8x128xf32>
    %5 = arith.addf %2, %4 : vector<8x128xf32>
    %6 = arith.subf %5, %1 : vector<8x128xf32>
    %c0_3 = arith.constant 0 : index
    %c0_4 = arith.constant 0 : index
    %7 = vector.load %arg3[%c0_3, %c0_4] : memref<8x128xf32, #tpu.memory_space<vmem>>, vector<8x128xf32>
    tpu.vector_store %arg3[%c0_3, %c0_4], %6 {strides = array<i32>} : memref<8x128xf32, #tpu.memory_space<vmem>>, vector<8x128xf32>,
    return
  }
  func.func @transform_0(%arg0: i32) -> (i32, i32) {
    %c0_i32 = arith.constant 0 : i32
    %c0_i32_0 = arith.constant 0 : i32
    return %arg0, %c0_i32 : i32, i32
  }
  func.func @transform_1(%arg0: i32) -> (i32, i32) {
    %c0_i32 = arith.constant 0 : i32
    %c0_i32_0 = arith.constant 0 : i32
    return %arg0, %c0_i32 : i32, i32
  }
  func.func @transform_2(%arg0: i32) -> (i32, i32) {
    %c0_i32 = arith.constant 0 : i32
    %c0_i32_0 = arith.constant 0 : i32
    return %arg0, %c0_i32 : i32, i32
  }
}

</mosaic_0001>

<llo_original>
// kernel: tpu_custom_call.1
$region0: #{tpu_custom_call.1}
  #allocation0 [shape = 'u32[]', space=smem, size = 0x4, offset = 0x4, fixed_abs, tag = 'smem constant byte address 0x4 - core index']
  #allocation1 [shape = 'u32[144,128]{1,0:T(1,128)}', space=vmem, size = 0x12000, scoped, tag = 'internal scratch']
  %s0 = inlined_call_operand.hbm [shape: f32[8,128], index: 0, kind: input, shape index: {}]
  %s1 = inlined_call_operand.hbm [shape: f32[8,128], index: 1, kind: input, shape index: {}]
  %s2 = inlined_call_operand.hbm [shape: f32[8,128], index: 2, kind: output, shape index: {}]
  %s3 = sld [smem:[#allocation0]]
  $region26: #{tpu_custom_call.1} parent=0
    _
  %s5 = ssub.s32 1, %s3
  %s6 = scalar_select 0, %s5, %s3
  $region1: #{tpu_custom_call.1} parent=0
    #allocation2 [shape = 'u8[4096]{0}', space=vmem, size = 0x1000, scoped, tag = 'input window, operand 0, single buffered']
    #allocation3 [shape = 's32[1]{0}', space=sflag, size = 0x4, scoped, tag = 'scoped memory for tpu_custom_call.1']
    #allocation4 [shape = 's32[1]{0}', space=sflag, size = 0x4, scoped, tag = 'scoped memory for tpu_custom_call.1']
    #allocation5 [shape = 'u8[4096]{0}', space=vmem, size = 0x1000, scoped, tag = 'input window, operand 1, single buffered']
    #allocation6 [shape = 's32[1]{0}', space=sflag, size = 0x4, scoped, tag = 'scoped memory for tpu_custom_call.1']
    #allocation7 [shape = 'u8[4096]{0}', space=vmem, size = 0x1000, scoped, tag = 'output window, operand 0, single buffered']
    %7 = vsyncpa [#allocation3], 0
    %8 = vsyncpa [#allocation6], 0
    %9 = vsyncpa [#allocation4], 0
    // Predicated region
    $region2: #{tpu_custom_call.1} parent=1 // pred_check
      _
    $region3: #{tpu_custom_call.1} parent=1 // pred_check_branch
      %11 = sbr.rel (0) target = $region5
    $region4: #{tpu_custom_call.1} parent=1 // pred_region
      %s13 = ssub.s32 128, 128
      %14 = vsyncadd [#allocation3], %s13
      %s16 = sshll.u32 [#allocation2], 4
      %s17 = int_to_ptr.vmem [resolvable:$true] %s16
      %19 = dma.hbm_to_vmem [thread:$0]  %s0, 128, %s17, [#allocation3]
    $region5: #{tpu_custom_call.1} parent=1 // pred_fallthru
      _
    // Predicated region
    $region6: #{tpu_custom_call.1} parent=1 // pred_check
      _
    $region7: #{tpu_custom_call.1} parent=1 // pred_check_branch
      %21 = sbr.rel (0) target = $region9
    $region8: #{tpu_custom_call.1} parent=1 // pred_region
      %s23 = ssub.s32 128, 128
      %24 = vsyncadd [#allocation6], %s23
      %s26 = sshll.u32 [#allocation5], 4
      %s27 = int_to_ptr.vmem [resolvable:$true] %s26
      %29 = dma.hbm_to_vmem [thread:$0]  %s1, 128, %s27, [#allocation6]
    $region9: #{tpu_custom_call.1} parent=1 // pred_fallthru
      _
    // Predicated region
    $region10: #{tpu_custom_call.1} parent=1 // pred_check
      _
    $region11: #{tpu_custom_call.1} parent=1 // pred_check_branch
      %31 = sbr.rel (0) target = $region13
    $region12: #{tpu_custom_call.1} parent=1 // pred_region
      %32 = dma.done [#allocation3], 128
    $region13: #{tpu_custom_call.1} parent=1 // pred_fallthru
      _
    // Predicated region
    $region14: #{tpu_custom_call.1} parent=1 // pred_check
      _
    $region15: #{tpu_custom_call.1} parent=1 // pred_check_branch
      %34 = sbr.rel (0) target = $region17
    $region16: #{tpu_custom_call.1} parent=1 // pred_region
      %35 = dma.done [#allocation6], 128
    $region17: #{tpu_custom_call.1} parent=1 // pred_fallthru
      _
    %v36 = vld [vmem:[#allocation2] sm:$0xff]
    %v37 = vld [vmem:[#allocation5] sm:$0xff]
    %v38 = vmul.f32 %v36, %v37
    %v39 = vsub.f32 %v36, %v36
    %v40 = vrcp.pop %v37
    %v41 = vmul.f32 %v39, %v40
    %v42 = vadd.f32 %v38, %v41
    %v43 = vsub.f32 %v42, %v37
    %44 = vst [vmem:[#allocation7] sm:$0xff] %v43
    // Predicated region
    $region18: #{tpu_custom_call.1} parent=1 // pred_check
      _
    $region19: #{tpu_custom_call.1} parent=1 // pred_check_branch
      %46 = sbr.rel (0) target = $region21
    $region20: #{tpu_custom_call.1} parent=1 // pred_region
      %s48 = ssub.s32 128, 128
      %49 = vsyncadd [#allocation4], %s48
      %s51 = sshll.u32 [#allocation7], 4
      %s52 = int_to_ptr.vmem [resolvable:$true] %s51
      %54 = dma.vmem_to_hbm [thread:$0]  %s52, 128, %s2, [#allocation4]
    $region21: #{tpu_custom_call.1} parent=1 // pred_fallthru
      _
    // Predicated region
    $region22: #{tpu_custom_call.1} parent=1 // pred_check
      _
    $region23: #{tpu_custom_call.1} parent=1 // pred_check_branch
      %56 = sbr.rel (0) target = $region25
    $region24: #{tpu_custom_call.1} parent=1 // pred_region
      %57 = dma.done [#allocation4], 128
    $region25: #{tpu_custom_call.1} parent=1 // pred_fallthru
      _
    %58 = vsyncpa [#allocation3], 1
    %59 = vsyncpa [#allocation6], 1
    %60 = vsyncpa [#allocation4], 1

</llo_original>
